<compile_context>
chip_gen: v7x
topology: tpu7x:2x2x1
jax: 0.10.0
libtpu: 0.0.40
codegen_flags: <defaults>
</compile_context>

<pallas_src>
import math

import jax
import jax.numpy as jnp
from jax.experimental import pallas as pl
from jax.experimental.pallas import tpu as pltpu

# Small synthetic "params" for NAOMI (deterministic, in-script).
T = 8          # sequence length
B = 2          # batch
Y_DIM = 4      # observation dim
RNN_DIM = 32   # GRU hidden dim (n_layers = 1)
DEC_DIM = 16   # dec1_dim (resolution level 1 decoder)
LOG_2PI = math.log(2.0 * math.pi)

H = RNN_DIM
H2 = 2 * RNN_DIM      # fwd+bwd hidden stacked along lanes: [h_f | h_b]
G = 6 * RNN_DIM       # fused gate width, lane layout [r_f r_b | z_f z_b | n_f n_b]


def naomi_forward_kernel(x_ref, wih_ref, whh_ref, wd_ref, wms_ref, b_ref,
                         loss_ref):
    D = Y_DIM

    x = x_ref[...]                                   # (T*B, 2D) f32: [data | gt_rev]
    b_all = b_ref[...]                               # (4, G) f32
    b_gi = b_all[0:1, :]
    b_ghn = jnp.broadcast_to(b_all[1:2, :], (B, G))  # hoisted broadcast (n-gate hh bias)
    b_dec = b_all[2:3, 0:DEC_DIM]
    b_ms = b_all[3:4, 0:2 * D]

    whh = whh_ref[...]                               # (2H, G) bf16, block-diagonal

    # One fused input projection for both GRUs and every timestep.
    gi_all = jnp.dot(x.astype(jnp.bfloat16), wih_ref[...],
                     preferred_element_type=jnp.float32) + b_gi   # (T*B, G)

    # Interleaved fwd/bwd recurrence: one block-diagonal MXU push per step
    # drives both GRUs (fwd GRU at time i, bwd GRU at time T-1-i).
    h = jnp.zeros((B, H2), jnp.float32)              # [h_fwd | h_bwd]
    hs = []
    for i in range(T):
        gi = gi_all[i * B:(i + 1) * B, :]            # static sublane slice
        gh = jnp.dot(h.astype(jnp.bfloat16), whh,
                     preferred_element_type=jnp.float32) + b_ghn  # (B, G)
        rz = jax.nn.sigmoid(gi[:, 0:2 * H2] + gh[:, 0:2 * H2])    # r and z together
        r = rz[:, 0:H2]
        z = rz[:, H2:2 * H2]
        n = jnp.tanh(gi[:, 2 * H2:G] + r * gh[:, 2 * H2:G])
        h = (1.0 - z) * n + z * h
        hs.append(h)

    # Decoder slab: rows [h_fwd[t] | h_bwd[t+2]] for t = 0..T-3.
    #   hs[i][:, 0:H]  = h_fwd at time i
    #   hs[i][:, H:H2] = h_bwd at time T-1-i   =>   h_bwd[t+2] = hs[T-3-t][:, H:H2]
    rows = [jnp.concatenate([hs[t][:, 0:H], hs[T - 3 - t][:, H:H2]], axis=1)
            for t in range(T - 2)]
    hfb = jnp.concatenate(rows, axis=0)              # ((T-2)*B, 2H)

    # Targets gt[t+1]: gt is time-reversed inside x, so gt[s] lives at row
    # block T-1-s, lanes D:2D (kept f32, never bf16-rounded).
    tgt = jnp.concatenate(
        [x[(T - 2 - t) * B:(T - 1 - t) * B, D:2 * D] for t in range(T - 2)],
        axis=0)                                      # ((T-2)*B, D)

    pre = jnp.dot(hfb.astype(jnp.bfloat16), wd_ref[...],
                  preferred_element_type=jnp.float32) + b_dec
    dec = jnp.maximum(pre, 0.0)                                      # ReLU
    ms = jnp.dot(dec.astype(jnp.bfloat16), wms_ref[...],
                 preferred_element_type=jnp.float32) + b_ms          # [mean | s_pre]
    mean = ms[:, 0:D]
    s_pre = ms[:, D:2 * D]
    # numerically stable softplus
    std = (jnp.maximum(s_pre, 0.0)
           + jnp.log1p(jnp.exp(-jnp.abs(s_pre))) + 1e-6)
    nll = jnp.sum(((tgt - mean) ** 2) / (2.0 * std * std)
                  + jnp.log(std) + 0.5 * LOG_2PI)
    loss_ref[0, 0] = nll


def _init_params(key):
    ks = jax.random.split(key, 14)
    Hh, D, Dd = RNN_DIM, Y_DIM, DEC_DIM
    s = 1.0 / math.sqrt(Hh)
    u = lambda k, shp, scale: jax.random.uniform(k, shp, jnp.float32, -scale, scale)
    return dict(
        wf_ih=u(ks[0], (D, 3 * Hh), s), wf_hh=u(ks[1], (Hh, 3 * Hh), s),
        bf_ih=u(ks[2], (1, 3 * Hh), s), bf_hh=u(ks[3], (1, 3 * Hh), s),
        wb_ih=u(ks[4], (D, 3 * Hh), s), wb_hh=u(ks[5], (Hh, 3 * Hh), s),
        bb_ih=u(ks[6], (1, 3 * Hh), s), bb_hh=u(ks[7], (1, 3 * Hh), s),
        wd=u(ks[8], (2 * Hh, Dd), 1.0 / math.sqrt(2 * Hh)),
        bd=u(ks[9], (1, Dd), 1.0 / math.sqrt(2 * Hh)),
        wm=u(ks[10], (Dd, D), 1.0 / math.sqrt(Dd)),
        bm=u(ks[11], (1, D), 1.0 / math.sqrt(Dd)),
        ws=u(ks[12], (Dd, D), 1.0 / math.sqrt(Dd)),
        bs=u(ks[13], (1, D), 1.0 / math.sqrt(Dd)),
    )


def _pack_params(p):
    """Build the fused parameter slabs consumed by the kernel.

    Lane layout of the fused gate axis (width 6H):
        [r_fwd | r_bwd | z_fwd | z_bwd | n_fwd | n_bwd]
    Hidden-state lane layout (width 2H): [h_fwd | h_bwd].
    r/z biases are pre-folded (ih+hh); the n-gate hh bias stays separate
    because it is multiplied by r inside the cell.
    """
    D, Dd = Y_DIM, DEC_DIM

    def split3(w):
        return w[:, 0:H], w[:, H:2 * H], w[:, 2 * H:3 * H]

    wfir, wfiz, wfin = split3(p["wf_ih"]); wfhr, wfhz, wfhn = split3(p["wf_hh"])
    wbir, wbiz, wbin = split3(p["wb_ih"]); wbhr, wbhz, wbhn = split3(p["wb_hh"])
    bfir, bfiz, bfin = split3(p["bf_ih"]); bfhr, bfhz, bfhn = split3(p["bf_hh"])
    bbir, bbiz, bbin = split3(p["bb_ih"]); bbhr, bbhz, bbhn = split3(p["bb_hh"])

    z_d = jnp.zeros((D, H), jnp.float32)
    z_h = jnp.zeros((H, H), jnp.float32)
    z_1 = jnp.zeros((1, H), jnp.float32)

    # input-projection weights: rows 0:D act on data (fwd GRU),
    # rows D:2D act on time-reversed gt (bwd GRU)
    w_ih_bd = jnp.concatenate([
        jnp.concatenate([wfir, z_d, wfiz, z_d, wfin, z_d], axis=1),
        jnp.concatenate([z_d, wbir, z_d, wbiz, z_d, wbin], axis=1)], axis=0)

    # recurrent weights: rows 0:H act on h_fwd, rows H:2H on h_bwd
    w_hh_bd = jnp.concatenate([
        jnp.concatenate([wfhr, z_h, wfhz, z_h, wfhn, z_h], axis=1),
        jnp.concatenate([z_h, wbhr, z_h, wbhz, z_h, wbhn], axis=1)], axis=0)

    b_gi = jnp.concatenate([bfir + bfhr, bbir + bbhr,
                            bfiz + bfhz, bbiz + bbhz,
                            bfin, bbin], axis=1)                     # (1, 6H)
    b_ghn = jnp.concatenate([z_1, z_1, z_1, z_1, bfhn, bbhn], axis=1)

    pad = lambda v: jnp.pad(v, ((0, 0), (0, G - v.shape[1])))
    b_all = jnp.concatenate(
        [b_gi, b_ghn, pad(p["bd"]),
         pad(jnp.concatenate([p["bm"], p["bs"]], axis=1))], axis=0)  # (4, 6H)

    wms = jnp.concatenate([p["wm"], p["ws"]], axis=1)                # (Dd, 2D)

    return (w_ih_bd.astype(jnp.bfloat16), w_hh_bd.astype(jnp.bfloat16),
            p["wd"].astype(jnp.bfloat16), wms.astype(jnp.bfloat16), b_all)


def naomi_policy_apply(data, ground_truth, params, forward=True, sample=False):
    """Mirrors naomi_policy.forward: data/ground_truth are batch-major (B,T,D)."""
    assert not (forward and sample)
    assert not ((not forward) and (not sample))
    if sample:
        # TODO(synk): NAOMI.sample (recursive multiresolution imputation) is
        # not kernelized.
        raise NotImplementedError("sample path not implemented")

    # wrapper semantics: .transpose(0, 1) -> time-major (T, B, D)
    data_tm = jnp.transpose(data, (1, 0, 2)).astype(jnp.float32)
    gt_tm = jnp.transpose(ground_truth, (1, 0, 2)).astype(jnp.float32)

    # gt is time-reversed so the fwd/bwd recurrences interleave step-for-step.
    gt_rev = gt_tm[::-1]
    x_comb = jnp.concatenate([data_tm.reshape(T * B, Y_DIM),
                              gt_rev.reshape(T * B, Y_DIM)], axis=1)  # (T*B, 2D)

    w_ih_bd, w_hh_bd, wd, wms, b_all = _pack_params(params)
    args = (x_comb, w_ih_bd, w_hh_bd, wd, wms, b_all)

    out = pl.pallas_call(
        naomi_forward_kernel,
        out_shape=jax.ShapeDtypeStruct((1, 1), jnp.float32),
        in_specs=[pl.BlockSpec(memory_space=pltpu.MemorySpace.VMEM)] * len(args),
        out_specs=pl.BlockSpec(memory_space=pltpu.MemorySpace.SMEM),
    )(*args)
    return out[0, 0]


def naomi_policy_reference(data, ground_truth, params):
    """Pure-JAX reference of the same forward pass (for correctness check)."""
    data_tm = jnp.transpose(data, (1, 0, 2)).astype(jnp.float32)
    gt_tm = jnp.transpose(ground_truth, (1, 0, 2)).astype(jnp.float32)
    p = params

    def cell(x, h, w_ih, w_hh, b_ih, b_hh):
        gi = x @ w_ih + b_ih
        gh = h @ w_hh + b_hh
        r = jax.nn.sigmoid(gi[:, :H] + gh[:, :H])
        z = jax.nn.sigmoid(gi[:, H:2 * H] + gh[:, H:2 * H])
        n = jnp.tanh(gi[:, 2 * H:] + r * gh[:, 2 * H:])
        return (1.0 - z) * n + z * h

    h = jnp.zeros((B, H), jnp.float32)
    hf = []
    for t in range(T):
        h = cell(data_tm[t], h, p["wf_ih"], p["wf_hh"], p["bf_ih"], p["bf_hh"])
        hf.append(h)
    h = jnp.zeros((B, H), jnp.float32)
    hb = [None] * T
    for t in range(T - 1, -1, -1):
        h = cell(gt_tm[t], h, p["wb_ih"], p["wb_hh"], p["bb_ih"], p["bb_hh"])
        hb[t] = h

    loss = jnp.float32(0.0)
    for t in range(T - 2):
        pre = hf[t] @ p["wd"][:H] + hb[t + 2] @ p["wd"][H:] + p["bd"]
        dec = jnp.maximum(pre, 0.0)
        mean = dec @ p["wm"] + p["bm"]
        std = jnp.log(1.0 + jnp.exp(dec @ p["ws"] + p["bs"])) + 1e-6
        target = gt_tm[t + 1]
        loss = loss + jnp.sum(((target - mean) ** 2) / (2.0 * std * std)
                              + jnp.log(std) + 0.5 * LOG_2PI)
    return loss


if __name__ == "__main__":
    key = jax.random.PRNGKey(0)
    k_data, k_gt, k_param = jax.random.split(key, 3)

    # batch-major inputs, as naomi_policy receives them: (B, T, Y_DIM)
    data = jax.random.normal(k_data, (B, T, Y_DIM), jnp.float32)
    ground_truth = jax.random.normal(k_gt, (B, T, Y_DIM), jnp.float32)
    params = _init_params(k_param)

    loss = naomi_policy_apply(data, ground_truth, params, forward=True,
                              sample=False)
    loss = jax.block_until_ready(loss)

    # Reference in full-fp32 matmul precision (kernel uses bf16 operands with
    # f32 accumulation; tolerance absorbs the bf16-pass error).
    with jax.default_matmul_precision("highest"):
        ref = jax.block_until_ready(
            naomi_policy_reference(data, ground_truth, params))

    assert jnp.isfinite(loss), "kernel produced non-finite loss"
    assert jnp.allclose(loss, ref, rtol=2e-2, atol=2e-2), (loss, ref)

    print("KERNEL_OK")
</pallas_src>

<mosaic_0001>
module attributes {stable_mosaic.version = 11 : i64} {
  func.func @naomi_forward_kernel(%arg0: memref<16x8xf32, #tpu.memory_space<vmem>>, %arg1: memref<8x192xbf16, #tpu.memory_space<vmem>>, %arg2: memref<64x192xbf16, #tpu.memory_space<vmem>>, %arg3: memref<64x16xbf16, #tpu.memory_space<vmem>>, %arg4: memref<16x8xbf16, #tpu.memory_space<vmem>>, %arg5: memref<4x192xf32, #tpu.memory_space<vmem>>, %arg6: memref<1x1xf32, #tpu.memory_space<smem>>) attributes {dimension_semantics = [], scalar_prefetch = 0 : i64, scratch_operands = 0 : i64, tpu.core_type = #tpu.core_type<tc>} {
    %c0 = arith.constant 0 : index
    %c0_0 = arith.constant 0 : index
    %0 = vector.load %arg0[%c0, %c0_0] : memref<16x8xf32, #tpu.memory_space<vmem>>, vector<16x8xf32>
    %c0_1 = arith.constant 0 : index
    %c0_2 = arith.constant 0 : index
    %1 = vector.load %arg5[%c0_1, %c0_2] : memref<4x192xf32, #tpu.memory_space<vmem>>, vector<4x192xf32>
    %2 = vector.extract_strided_slice %1 {offsets = [0, 0], sizes = [1, 192], strides = [1, 1]} : vector<4x192xf32> to vector<1x192xf32>
    %3 = vector.extract_strided_slice %1 {offsets = [1, 0], sizes = [1, 192], strides = [1, 1]} : vector<4x192xf32> to vector<1x192xf32>
    %4 = vector.shape_cast %3 : vector<1x192xf32> to vector<1x192xf32>
    %5 = vector.broadcast %4 : vector<1x192xf32> to vector<2x192xf32>
    %6 = vector.extract_strided_slice %1 {offsets = [2, 0], sizes = [1, 16], strides = [1, 1]} : vector<4x192xf32> to vector<1x16xf32>
    %7 = vector.extract_strided_slice %1 {offsets = [3, 0], sizes = [1, 8], strides = [1, 1]} : vector<4x192xf32> to vector<1x8xf32>
    %c0_3 = arith.constant 0 : index
    %c0_4 = arith.constant 0 : index
    %8 = vector.load %arg2[%c0_3, %c0_4] : memref<64x192xbf16, #tpu.memory_space<vmem>>, vector<64x192xbf16>
    %9 = arith.truncf %0 : vector<16x8xf32> to vector<16x8xbf16>
    %c0_5 = arith.constant 0 : index
    %c0_6 = arith.constant 0 : index
    %10 = vector.load %arg1[%c0_5, %c0_6] : memref<8x192xbf16, #tpu.memory_space<vmem>>, vector<8x192xbf16>
    %cst = arith.constant dense<0.000000e+00> : vector<16x192xf32>
    %11 = tpu.matmul %9, %10, %cst {dimension_numbers = #tpu.dot_dimension_numbers<[1], [0], [0], [1], [0, 0, 1, 1], [], []>} : vector<16x8xbf16>, vector<8x192xbf16>, vector<16x192xf32> -> vector<16x192xf32>
    %12 = vector.broadcast %2 : vector<1x192xf32> to vector<16x192xf32>
    %13 = arith.addf %11, %12 : vector<16x192xf32>
    %cst_7 = arith.constant 0.000000e+00 : f32
    %14 = vector.broadcast %cst_7 : f32 to vector<2x64xf32>
    %15 = vector.extract_strided_slice %13 {offsets = [0, 0], sizes = [2, 192], strides = [1, 1]} : vector<16x192xf32> to vector<2x192xf32>
    %16 = arith.truncf %14 : vector<2x64xf32> to vector<2x64xbf16>
    %cst_8 = arith.constant dense<0.000000e+00> : vector<2x192xf32>
    %17 = tpu.matmul %16, %8, %cst_8 {dimension_numbers = #tpu.dot_dimension_numbers<[1], [0], [0], [1], [0, 0, 1, 1], [], []>} : vector<2x64xbf16>, vector<64x192xbf16>, vector<2x192xf32> -> vector<2x192xf32>
    %18 = arith.addf %17, %5 : vector<2x192xf32>
    %19 = vector.extract_strided_slice %15 {offsets = [0, 0], sizes = [2, 128], strides = [1, 1]} : vector<2x192xf32> to vector<2x128xf32>
    %20 = vector.extract_strided_slice %18 {offsets = [0, 0], sizes = [2, 128], strides = [1, 1]} : vector<2x192xf32> to vector<2x128xf32>
    %21 = arith.addf %19, %20 : vector<2x128xf32>
    %22 = arith.negf %21 : vector<2x128xf32>
    %23 = math.exp %22 : vector<2x128xf32>
    %cst_9 = arith.constant 1.000000e+00 : f32
    %24 = vector.broadcast %cst_9 : f32 to vector<2x128xf32>
    %25 = arith.addf %24, %23 : vector<2x128xf32>
    %26 = arith.divf %24, %25 : vector<2x128xf32>
    %27 = vector.extract_strided_slice %26 {offsets = [0, 0], sizes = [2, 64], strides = [1, 1]} : vector<2x128xf32> to vector<2x64xf32>
    %28 = vector.extract_strided_slice %26 {offsets = [0, 64], sizes = [2, 64], strides = [1, 1]} : vector<2x128xf32> to vector<2x64xf32>
    %29 = vector.extract_strided_slice %15 {offsets = [0, 128], sizes = [2, 64], strides = [1, 1]} : vector<2x192xf32> to vector<2x64xf32>
    %30 = vector.extract_strided_slice %18 {offsets = [0, 128], sizes = [2, 64], strides = [1, 1]} : vector<2x192xf32> to vector<2x64xf32>
    %31 = arith.mulf %27, %30 : vector<2x64xf32>
    %32 = arith.addf %29, %31 : vector<2x64xf32>
    %33 = math.tanh %32 : vector<2x64xf32>
    %cst_10 = arith.constant 1.000000e+00 : f32
    %34 = vector.broadcast %cst_10 : f32 to vector<2x64xf32>
    %35 = arith.subf %34, %28 : vector<2x64xf32>
    %36 = arith.mulf %35, %33 : vector<2x64xf32>
    %37 = arith.mulf %28, %14 : vector<2x64xf32>
    %38 = arith.addf %36, %37 : vector<2x64xf32>
    %39 = vector.extract_strided_slice %13 {offsets = [2, 0], sizes = [2, 192], strides = [1, 1]} : vector<16x192xf32> to vector<2x192xf32>
    %40 = arith.truncf %38 : vector<2x64xf32> to vector<2x64xbf16>
    %cst_11 = arith.constant dense<0.000000e+00> : vector<2x192xf32>
    %41 = tpu.matmul %40, %8, %cst_11 {dimension_numbers = #tpu.dot_dimension_numbers<[1], [0], [0], [1], [0, 0, 1, 1], [], []>} : vector<2x64xbf16>, vector<64x192xbf16>, vector<2x192xf32> -> vector<2x192xf32>
    %42 = arith.addf %41, %5 : vector<2x192xf32>
    %43 = vector.extract_strided_slice %39 {offsets = [0, 0], sizes = [2, 128], strides = [1, 1]} : vector<2x192xf32> to vector<2x128xf32>
    %44 = vector.extract_strided_slice %42 {offsets = [0, 0], sizes = [2, 128], strides = [1, 1]} : vector<2x192xf32> to vector<2x128xf32>
    %45 = arith.addf %43, %44 : vector<2x128xf32>
    %46 = arith.negf %45 : vector<2x128xf32>
    %47 = math.exp %46 : vector<2x128xf32>
    %cst_12 = arith.constant 1.000000e+00 : f32
    %48 = vector.broadcast %cst_12 : f32 to vector<2x128xf32>
    %49 = arith.addf %48, %47 : vector<2x128xf32>
    %50 = arith.divf %48, %49 : vector<2x128xf32>
    %51 = vector.extract_strided_slice %50 {offsets = [0, 0], sizes = [2, 64], strides = [1, 1]} : vector<2x128xf32> to vector<2x64xf32>
    %52 = vector.extract_strided_slice %50 {offsets = [0, 64], sizes = [2, 64], strides = [1, 1]} : vector<2x128xf32> to vector<2x64xf32>
    %53 = vector.extract_strided_slice %39 {offsets = [0, 128], sizes = [2, 64], strides = [1, 1]} : vector<2x192xf32> to vector<2x64xf32>
    %54 = vector.extract_strided_slice %42 {offsets = [0, 128], sizes = [2, 64], strides = [1, 1]} : vector<2x192xf32> to vector<2x64xf32>
    %55 = arith.mulf %51, %54 : vector<2x64xf32>
    %56 = arith.addf %53, %55 : vector<2x64xf32>
    %57 = math.tanh %56 : vector<2x64xf32>
    %cst_13 = arith.constant 1.000000e+00 : f32
    %58 = vector.broadcast %cst_13 : f32 to vector<2x64xf32>
    %59 = arith.subf %58, %52 : vector<2x64xf32>
    %60 = arith.mulf %59, %57 : vector<2x64xf32>
    %61 = arith.mulf %52, %38 : vector<2x64xf32>
    %62 = arith.addf %60, %61 : vector<2x64xf32>
    %63 = vector.extract_strided_slice %13 {offsets = [4, 0], sizes = [2, 192], strides = [1, 1]} : vector<16x192xf32> to vector<2x192xf32>
    %64 = arith.truncf %62 : vector<2x64xf32> to vector<2x64xbf16>
    %cst_14 = arith.constant dense<0.000000e+00> : vector<2x192xf32>
    %65 = tpu.matmul %64, %8, %cst_14 {dimension_numbers = #tpu.dot_dimension_numbers<[1], [0], [0], [1], [0, 0, 1, 1], [], []>} : vector<2x64xbf16>, vector<64x192xbf16>, vector<2x192xf32> -> vector<2x192xf32>
    %66 = arith.addf %65, %5 : vector<2x192xf32>
    %67 = vector.extract_strided_slice %63 {offsets = [0, 0], sizes = [2, 128], strides = [1, 1]} : vector<2x192xf32> to vector<2x128xf32>
    %68 = vector.extract_strided_slice %66 {offsets = [0, 0], sizes = [2, 128], strides = [1, 1]} : vector<2x192xf32> to vector<2x128xf32>
    %69 = arith.addf %67, %68 : vector<2x128xf32>
    %70 = arith.negf %69 : vector<2x128xf32>
    %71 = math.exp %70 : vector<2x128xf32>
    %cst_15 = arith.constant 1.000000e+00 : f32
    %72 = vector.broadcast %cst_15 : f32 to vector<2x128xf32>
    %73 = arith.addf %72, %71 : vector<2x128xf32>
    %74 = arith.divf %72, %73 : vector<2x128xf32>
    %75 = vector.extract_strided_slice %74 {offsets = [0, 0], sizes = [2, 64], strides = [1, 1]} : vector<2x128xf32> to vector<2x64xf32>
    %76 = vector.extract_strided_slice %74 {offsets = [0, 64], sizes = [2, 64], strides = [1, 1]} : vector<2x128xf32> to vector<2x64xf32>
    %77 = vector.extract_strided_slice %63 {offsets = [0, 128], sizes = [2, 64], strides = [1, 1]} : vector<2x192xf32> to vector<2x64xf32>
    %78 = vector.extract_strided_slice %66 {offsets = [0, 128], sizes = [2, 64], strides = [1, 1]} : vector<2x192xf32> to vector<2x64xf32>
    %79 = arith.mulf %75, %78 : vector<2x64xf32>
    %80 = arith.addf %77, %79 : vector<2x64xf32>
    %81 = math.tanh %80 : vector<2x64xf32>
    %cst_16 = arith.constant 1.000000e+00 : f32
    %82 = vector.broadcast %cst_16 : f32 to vector<2x64xf32>
    %83 = arith.subf %82, %76 : vector<2x64xf32>
    %84 = arith.mulf %83, %81 : vector<2x64xf32>
    %85 = arith.mulf %76, %62 : vector<2x64xf32>
    %86 = arith.addf %84, %85 : vector<2x64xf32>
    %87 = vector.extract_strided_slice %13 {offsets = [6, 0], sizes = [2, 192], strides = [1, 1]} : vector<16x192xf32> to vector<2x192xf32>
    %88 = arith.truncf %86 : vector<2x64xf32> to vector<2x64xbf16>
    %cst_17 = arith.constant dense<0.000000e+00> : vector<2x192xf32>
    %89 = tpu.matmul %88, %8, %cst_17 {dimension_numbers = #tpu.dot_dimension_numbers<[1], [0], [0], [1], [0, 0, 1, 1], [], []>} : vector<2x64xbf16>, vector<64x192xbf16>, vector<2x192xf32> -> vector<2x192xf32>
    %90 = arith.addf %89, %5 : vector<2x192xf32>
    %91 = vector.extract_strided_slice %87 {offsets = [0, 0], sizes = [2, 128], strides = [1, 1]} : vector<2x192xf32> to vector<2x128xf32>
    %92 = vector.extract_strided_slice %90 {offsets = [0, 0], sizes = [2, 128], strides = [1, 1]} : vector<2x192xf32> to vector<2x128xf32>
    %93 = arith.addf %91, %92 : vector<2x128xf32>
    %94 = arith.negf %93 : vector<2x128xf32>
    %95 = math.exp %94 : vector<2x128xf32>
    %cst_18 = arith.constant 1.000000e+00 : f32
    %96 = vector.broadcast %cst_18 : f32 to vector<2x128xf32>
    %97 = arith.addf %96, %95 : vector<2x128xf32>
    %98 = arith.divf %96, %97 : vector<2x128xf32>
    %99 = vector.extract_strided_slice %98 {offsets = [0, 0], sizes = [2, 64], strides = [1, 1]} : vector<2x128xf32> to vector<2x64xf32>
    %100 = vector.extract_strided_slice %98 {offsets = [0, 64], sizes = [2, 64], strides = [1, 1]} : vector<2x128xf32> to vector<2x64xf32>
    %101 = vector.extract_strided_slice %87 {offsets = [0, 128], sizes = [2, 64], strides = [1, 1]} : vector<2x192xf32> to vector<2x64xf32>
    %102 = vector.extract_strided_slice %90 {offsets = [0, 128], sizes = [2, 64], strides = [1, 1]} : vector<2x192xf32> to vector<2x64xf32>
    %103 = arith.mulf %99, %102 : vector<2x64xf32>
    %104 = arith.addf %101, %103 : vector<2x64xf32>
    %105 = math.tanh %104 : vector<2x64xf32>
    %cst_19 = arith.constant 1.000000e+00 : f32
    %106 = vector.broadcast %cst_19 : f32 to vector<2x64xf32>
    %107 = arith.subf %106, %100 : vector<2x64xf32>
    %108 = arith.mulf %107, %105 : vector<2x64xf32>
    %109 = arith.mulf %100, %86 : vector<2x64xf32>
    %110 = arith.addf %108, %109 : vector<2x64xf32>
    %111 = vector.extract_strided_slice %13 {offsets = [8, 0], sizes = [2, 192], strides = [1, 1]} : vector<16x192xf32> to vector<2x192xf32>
    %112 = arith.truncf %110 : vector<2x64xf32> to vector<2x64xbf16>
    %cst_20 = arith.constant dense<0.000000e+00> : vector<2x192xf32>
    %113 = tpu.matmul %112, %8, %cst_20 {dimension_numbers = #tpu.dot_dimension_numbers<[1], [0], [0], [1], [0, 0, 1, 1], [], []>} : vector<2x64xbf16>, vector<64x192xbf16>, vector<2x192xf32> -> vector<2x192xf32>
    %114 = arith.addf %113, %5 : vector<2x192xf32>
    %115 = vector.extract_strided_slice %111 {offsets = [0, 0], sizes = [2, 128], strides = [1, 1]} : vector<2x192xf32> to vector<2x128xf32>
    %116 = vector.extract_strided_slice %114 {offsets = [0, 0], sizes = [2, 128], strides = [1, 1]} : vector<2x192xf32> to vector<2x128xf32>
    %117 = arith.addf %115, %116 : vector<2x128xf32>
    %118 = arith.negf %117 : vector<2x128xf32>
    %119 = math.exp %118 : vector<2x128xf32>
    %cst_21 = arith.constant 1.000000e+00 : f32
    %120 = vector.broadcast %cst_21 : f32 to vector<2x128xf32>
    %121 = arith.addf %120, %119 : vector<2x128xf32>
    %122 = arith.divf %120, %121 : vector<2x128xf32>
    %123 = vector.extract_strided_slice %122 {offsets = [0, 0], sizes = [2, 64], strides = [1, 1]} : vector<2x128xf32> to vector<2x64xf32>
    %124 = vector.extract_strided_slice %122 {offsets = [0, 64], sizes = [2, 64], strides = [1, 1]} : vector<2x128xf32> to vector<2x64xf32>
    %125 = vector.extract_strided_slice %111 {offsets = [0, 128], sizes = [2, 64], strides = [1, 1]} : vector<2x192xf32> to vector<2x64xf32>
    %126 = vector.extract_strided_slice %114 {offsets = [0, 128], sizes = [2, 64], strides = [1, 1]} : vector<2x192xf32> to vector<2x64xf32>
    %127 = arith.mulf %123, %126 : vector<2x64xf32>
    %128 = arith.addf %125, %127 : vector<2x64xf32>
    %129 = math.tanh %128 : vector<2x64xf32>
    %cst_22 = arith.constant 1.000000e+00 : f32
    %130 = vector.broadcast %cst_22 : f32 to vector<2x64xf32>
    %131 = arith.subf %130, %124 : vector<2x64xf32>
    %132 = arith.mulf %131, %129 : vector<2x64xf32>
    %133 = arith.mulf %124, %110 : vector<2x64xf32>
    %134 = arith.addf %132, %133 : vector<2x64xf32>
    %135 = vector.extract_strided_slice %13 {offsets = [10, 0], sizes = [2, 192], strides = [1, 1]} : vector<16x192xf32> to vector<2x192xf32>
    %136 = arith.truncf %134 : vector<2x64xf32> to vector<2x64xbf16>
    %cst_23 = arith.constant dense<0.000000e+00> : vector<2x192xf32>
    %137 = tpu.matmul %136, %8, %cst_23 {dimension_numbers = #tpu.dot_dimension_numbers<[1], [0], [0], [1], [0, 0, 1, 1], [], []>} : vector<2x64xbf16>, vector<64x192xbf16>, vector<2x192xf32> -> vector<2x192xf32>
    %138 = arith.addf %137, %5 : vector<2x192xf32>
    %139 = vector.extract_strided_slice %135 {offsets = [0, 0], sizes = [2, 128], strides = [1, 1]} : vector<2x192xf32> to vector<2x128xf32>
    %140 = vector.extract_strided_slice %138 {offsets = [0, 0], sizes = [2, 128], strides = [1, 1]} : vector<2x192xf32> to vector<2x128xf32>
    %141 = arith.addf %139, %140 : vector<2x128xf32>
    %142 = arith.negf %141 : vector<2x128xf32>
    %143 = math.exp %142 : vector<2x128xf32>
    %cst_24 = arith.constant 1.000000e+00 : f32
    %144 = vector.broadcast %cst_24 : f32 to vector<2x128xf32>
    %145 = arith.addf %144, %143 : vector<2x128xf32>
    %146 = arith.divf %144, %145 : vector<2x128xf32>
    %147 = vector.extract_strided_slice %146 {offsets = [0, 0], sizes = [2, 64], strides = [1, 1]} : vector<2x128xf32> to vector<2x64xf32>
    %148 = vector.extract_strided_slice %146 {offsets = [0, 64], sizes = [2, 64], strides = [1, 1]} : vector<2x128xf32> to vector<2x64xf32>
    %149 = vector.extract_strided_slice %135 {offsets = [0, 128], sizes = [2, 64], strides = [1, 1]} : vector<2x192xf32> to vector<2x64xf32>
    %150 = vector.extract_strided_slice %138 {offsets = [0, 128], sizes = [2, 64], strides = [1, 1]} : vector<2x192xf32> to vector<2x64xf32>
    %151 = arith.mulf %147, %150 : vector<2x64xf32>
    %152 = arith.addf %149, %151 : vector<2x64xf32>
    %153 = math.tanh %152 : vector<2x64xf32>
    %cst_25 = arith.constant 1.000000e+00 : f32
    %154 = vector.broadcast %cst_25 : f32 to vector<2x64xf32>
    %155 = arith.subf %154, %148 : vector<2x64xf32>
    %156 = arith.mulf %155, %153 : vector<2x64xf32>
    %157 = arith.mulf %148, %134 : vector<2x64xf32>
    %158 = arith.addf %156, %157 : vector<2x64xf32>
    %159 = vector.extract_strided_slice %38 {offsets = [0, 0], sizes = [2, 32], strides = [1, 1]} : vector<2x64xf32> to vector<2x32xf32>
    %160 = vector.extract_strided_slice %158 {offsets = [0, 32], sizes = [2, 32], strides = [1, 1]} : vector<2x64xf32> to vector<2x32xf32>
    %161 = tpu.concatenate %159, %160 in 1 : vector<2x32xf32>, vector<2x32xf32> -> vector<2x64xf32>
    %162 = vector.extract_strided_slice %62 {offsets = [0, 0], sizes = [2, 32], strides = [1, 1]} : vector<2x64xf32> to vector<2x32xf32>
    %163 = vector.extract_strided_slice %134 {offsets = [0, 32], sizes = [2, 32], strides = [1, 1]} : vector<2x64xf32> to vector<2x32xf32>
    %164 = tpu.concatenate %162, %163 in 1 : vector<2x32xf32>, vector<2x32xf32> -> vector<2x64xf32>
    %165 = vector.extract_strided_slice %86 {offsets = [0, 0], sizes = [2, 32], strides = [1, 1]} : vector<2x64xf32> to vector<2x32xf32>
    %166 = vector.extract_strided_slice %110 {offsets = [0, 32], sizes = [2, 32], strides = [1, 1]} : vector<2x64xf32> to vector<2x32xf32>
    %167 = tpu.concatenate %165, %166 in 1 : vector<2x32xf32>, vector<2x32xf32> -> vector<2x64xf32>
    %168 = vector.extract_strided_slice %110 {offsets = [0, 0], sizes = [2, 32], strides = [1, 1]} : vector<2x64xf32> to vector<2x32xf32>
    %169 = vector.extract_strided_slice %86 {offsets = [0, 32], sizes = [2, 32], strides = [1, 1]} : vector<2x64xf32> to vector<2x32xf32>
    %170 = tpu.concatenate %168, %169 in 1 : vector<2x32xf32>, vector<2x32xf32> -> vector<2x64xf32>
    %171 = vector.extract_strided_slice %134 {offsets = [0, 0], sizes = [2, 32], strides = [1, 1]} : vector<2x64xf32> to vector<2x32xf32>
    %172 = vector.extract_strided_slice %62 {offsets = [0, 32], sizes = [2, 32], strides = [1, 1]} : vector<2x64xf32> to vector<2x32xf32>
    %173 = tpu.concatenate %171, %172 in 1 : vector<2x32xf32>, vector<2x32xf32> -> vector<2x64xf32>
    %174 = vector.extract_strided_slice %158 {offsets = [0, 0], sizes = [2, 32], strides = [1, 1]} : vector<2x64xf32> to vector<2x32xf32>
    %175 = vector.extract_strided_slice %38 {offsets = [0, 32], sizes = [2, 32], strides = [1, 1]} : vector<2x64xf32> to vector<2x32xf32>
    %176 = tpu.concatenate %174, %175 in 1 : vector<2x32xf32>, vector<2x32xf32> -> vector<2x64xf32>
    %177 = tpu.concatenate %161, %164, %167, %170, %173, %176 in 0 : vector<2x64xf32>, vector<2x64xf32>, vector<2x64xf32>, vector<2x64xf32>, vector<2x64xf32>, vector<2x64xf32> -> vector<12x64xf32>
    %178 = vector.extract_strided_slice %0 {offsets = [12, 4], sizes = [2, 4], strides = [1, 1]} : vector<16x8xf32> to vector<2x4xf32>
    %179 = vector.extract_strided_slice %0 {offsets = [10, 4], sizes = [2, 4], strides = [1, 1]} : vector<16x8xf32> to vector<2x4xf32>
    %180 = vector.extract_strided_slice %0 {offsets = [8, 4], sizes = [2, 4], strides = [1, 1]} : vector<16x8xf32> to vector<2x4xf32>
    %181 = vector.extract_strided_slice %0 {offsets = [6, 4], sizes = [2, 4], strides = [1, 1]} : vector<16x8xf32> to vector<2x4xf32>
    %182 = vector.extract_strided_slice %0 {offsets = [4, 4], sizes = [2, 4], strides = [1, 1]} : vector<16x8xf32> to vector<2x4xf32>
    %183 = vector.extract_strided_slice %0 {offsets = [2, 4], sizes = [2, 4], strides = [1, 1]} : vector<16x8xf32> to vector<2x4xf32>
    %184 = tpu.concatenate %178, %179, %180, %181, %182, %183 in 0 : vector<2x4xf32>, vector<2x4xf32>, vector<2x4xf32>, vector<2x4xf32>, vector<2x4xf32>, vector<2x4xf32> -> vector<12x4xf32>
    %185 = arith.truncf %177 : vector<12x64xf32> to vector<12x64xbf16>
    %c0_26 = arith.constant 0 : index
    %c0_27 = arith.constant 0 : index
    %186 = vector.load %arg3[%c0_26, %c0_27] : memref<64x16xbf16, #tpu.memory_space<vmem>>, vector<64x16xbf16>
    %cst_28 = arith.constant dense<0.000000e+00> : vector<12x16xf32>
    %187 = tpu.matmul %185, %186, %cst_28 {dimension_numbers = #tpu.dot_dimension_numbers<[1], [0], [0], [1], [0, 0, 1, 1], [], []>} : vector<12x64xbf16>, vector<64x16xbf16>, vector<12x16xf32> -> vector<12x16xf32>
    %188 = vector.broadcast %6 : vector<1x16xf32> to vector<12x16xf32>
    %189 = arith.addf %187, %188 : vector<12x16xf32>
    %cst_29 = arith.constant 0.000000e+00 : f32
    %190 = vector.broadcast %cst_29 : f32 to vector<12x16xf32>
    %191 = arith.maximumf %189, %190 : vector<12x16xf32>
    %192 = arith.truncf %191 : vector<12x16xf32> to vector<12x16xbf16>
    %c0_30 = arith.constant 0 : index
    %c0_31 = arith.constant 0 : index
    %193 = vector.load %arg4[%c0_30, %c0_31] : memref<16x8xbf16, #tpu.memory_space<vmem>>, vector<16x8xbf16>
    %cst_32 = arith.constant dense<0.000000e+00> : vector<12x8xf32>
    %194 = tpu.matmul %192, %193, %cst_32 {dimension_numbers = #tpu.dot_dimension_numbers<[1], [0], [0], [1], [0, 0, 1, 1], [], []>} : vector<12x16xbf16>, vector<16x8xbf16>, vector<12x8xf32> -> vector<12x8xf32>
    %195 = vector.broadcast %7 : vector<1x8xf32> to vector<12x8xf32>
    %196 = arith.addf %194, %195 : vector<12x8xf32>
    %197 = vector.extract_strided_slice %196 {offsets = [0, 0], sizes = [12, 4], strides = [1, 1]} : vector<12x8xf32> to vector<12x4xf32>
    %198 = vector.extract_strided_slice %196 {offsets = [0, 4], sizes = [12, 4], strides = [1, 1]} : vector<12x8xf32> to vector<12x4xf32>
    %cst_33 = arith.constant 0.000000e+00 : f32
    %199 = vector.broadcast %cst_33 : f32 to vector<12x4xf32>
    %200 = arith.maximumf %198, %199 : vector<12x4xf32>
    %201 = math.absf %198 : vector<12x4xf32>
    %cst_34 = arith.constant 0.000000e+00 : f32
    %202 = vector.broadcast %cst_34 : f32 to vector<12x4xf32>
    %203 = arith.subf %202, %201 : vector<12x4xf32>
    %204 = math.exp %203 : vector<12x4xf32>
    %205 = math.log1p %204 : vector<12x4xf32>
    %206 = arith.addf %200, %205 : vector<12x4xf32>
    %cst_35 = arith.constant 9.99999997E-7 : f32
    %207 = vector.broadcast %cst_35 : f32 to vector<12x4xf32>
    %208 = arith.addf %206, %207 : vector<12x4xf32>
    %209 = arith.subf %184, %197 : vector<12x4xf32>
    %210 = arith.mulf %209, %209 : vector<12x4xf32>
    %cst_36 = arith.constant 2.000000e+00 : f32
    %211 = vector.broadcast %cst_36 : f32 to vector<12x4xf32>
    %212 = arith.mulf %211, %208 : vector<12x4xf32>
    %213 = arith.mulf %212, %208 : vector<12x4xf32>
    %214 = arith.divf %210, %213 : vector<12x4xf32>
    %215 = math.log %208 : vector<12x4xf32>
    %216 = arith.addf %214, %215 : vector<12x4xf32>
    %cst_37 = arith.constant 0.918938517 : f32
    %217 = vector.broadcast %cst_37 : f32 to vector<12x4xf32>
    %218 = arith.addf %216, %217 : vector<12x4xf32>
    %219 = vector.shape_cast %218 : vector<12x4xf32> to vector<1x12x4xf32>
    %cst_38 = arith.constant dense<0.000000e+00> : vector<1xf32>
    %220 = vector.multi_reduction <add>, %219, %cst_38 [1, 2] : vector<1x12x4xf32> to vector<1xf32>
    %221 = vector.shape_cast %220 : vector<1xf32> to vector<1x1x1xf32>
    %222 = vector.extract %221[0, 0, 0] : f32 from vector<1x1x1xf32>
    %c0_39 = arith.constant 0 : index
    %c0_40 = arith.constant 0 : index
    %223 = memref.load %arg6[%c0_39, %c0_40] : memref<1x1xf32, #tpu.memory_space<smem>>
    memref.store %222, %arg6[%c0_39, %c0_40] : memref<1x1xf32, #tpu.memory_space<smem>>
    return
  }
}

</mosaic_0001>

<llo_original>
// kernel: tpu_custom_call.1
$region0: #{tpu_custom_call.1}
  #allocation0 [shape = 'u32[]', space=smem, size = 0x4, offset = 0x4, fixed_abs, tag = 'smem constant byte address 0x4 - core index']
  #allocation1 [shape = 'u32[144,128]{1,0:T(1,128)}', space=vmem, size = 0x12000, scoped, tag = 'internal scratch']
  %s0 = inlined_call_operand.vmem [shape: f32[16,8], index: 0, kind: input, shape index: {}]
  %s1 = inlined_call_operand.vmem [shape: bf16[8,192], index: 1, kind: input, shape index: {}]
  %s2 = inlined_call_operand.vmem [shape: bf16[64,192], index: 2, kind: input, shape index: {}]
  %s3 = inlined_call_operand.vmem [shape: bf16[64,16], index: 3, kind: input, shape index: {}]
  %s4 = inlined_call_operand.vmem [shape: bf16[16,8], index: 4, kind: input, shape index: {}]
  %s5 = inlined_call_operand.vmem [shape: f32[4,192], index: 5, kind: input, shape index: {}]
  %s6 = inlined_call_operand.hbm [shape: f32[1,1], index: 6, kind: output, shape index: {}]
  %s7 = sld [smem:[#allocation0]]
  $region34: #{tpu_custom_call.1} parent=0
    _
  %s9 = ssub.s32 1, %s7
  %s10 = scalar_select 0, %s9, %s7
  $region1: #{tpu_custom_call.1} parent=0
    #allocation2 [shape = 'u8[512]{0}', space=smem, size = 0x200, scoped, tag = 'output window, operand 0, single buffered']
    #allocation3 [shape = 's32[1]{0}', space=sflag, size = 0x4, scoped, tag = 'scoped memory for tpu_custom_call.1']
    %11 = vsyncpa [#allocation3], 0
    // Predicated region
    $region2: #{tpu_custom_call.1} parent=1 // pred_check
      _
    $region3: #{tpu_custom_call.1} parent=1 // pred_check_branch
      %13 = sbr.rel (0) target = $region5
    $region4: #{tpu_custom_call.1} parent=1 // pred_region
      _
    $region5: #{tpu_custom_call.1} parent=1 // pred_fallthru
      _
    // Predicated region
    $region6: #{tpu_custom_call.1} parent=1 // pred_check
      _
    $region7: #{tpu_custom_call.1} parent=1 // pred_check_branch
      %15 = sbr.rel (0) target = $region9
    $region8: #{tpu_custom_call.1} parent=1 // pred_region
      _
    $region9: #{tpu_custom_call.1} parent=1 // pred_fallthru
      _
    // Predicated region
    $region10: #{tpu_custom_call.1} parent=1 // pred_check
      _
    $region11: #{tpu_custom_call.1} parent=1 // pred_check_branch
      %17 = sbr.rel (0) target = $region13
    $region12: #{tpu_custom_call.1} parent=1 // pred_region
      _
    $region13: #{tpu_custom_call.1} parent=1 // pred_fallthru
      _
    // Predicated region
    $region14: #{tpu_custom_call.1} parent=1 // pred_check
      _
    $region15: #{tpu_custom_call.1} parent=1 // pred_check_branch
      %19 = sbr.rel (0) target = $region17
    $region16: #{tpu_custom_call.1} parent=1 // pred_region
      _
    $region17: #{tpu_custom_call.1} parent=1 // pred_fallthru
      _
    // Predicated region
    $region18: #{tpu_custom_call.1} parent=1 // pred_check
      _
    $region19: #{tpu_custom_call.1} parent=1 // pred_check_branch
      %21 = sbr.rel (0) target = $region21
    $region20: #{tpu_custom_call.1} parent=1 // pred_region
      _
    $region21: #{tpu_custom_call.1} parent=1 // pred_fallthru
      _
    // Predicated region
    $region22: #{tpu_custom_call.1} parent=1 // pred_check
      _
    $region23: #{tpu_custom_call.1} parent=1 // pred_check_branch
      %23 = sbr.rel (0) target = $region25
    $region24: #{tpu_custom_call.1} parent=1 // pred_region
      _
    $region25: #{tpu_custom_call.1} parent=1 // pred_fallthru
      _
    %v25 = vld [vmem:[%s0] sm:$0xff]
    %v26 = vld [vmem:[%s0 + $0x8] sm:$0xff]
    %v27 = vld [vmem:[%s5] sm:$0xff]
    %v29 = vlaneseq
    %v30 = vshrl.u32 %v29, 7
    %v31 = vsub.s32 1, %v30
    %v32 = vrot.slane %v27, %v31
    %v33 = vlaneseq
    %v34 = vshrl.u32 %v33, 7
    %v35 = vsub.s32 5, %v34
    %v36 = vrot.slane %v27, %v35
    %v39 = vlaneseq
    %v40 = vshrl.u32 %v39, 7
    %v41 = vsub.s32 1, %v40
    %v42 = vrot.slane %v32, %v41
    %v43 = vlaneseq
    %v44 = vshrl.u32 %v43, 7
    %v45 = vsub.s32 1, %v44
    %v46 = vrot.slane %v36, %v45
    %v47 = vld [vmem:[%s2] sm:$0xff]
    %v48 = vld [vmem:[%s2 + $0x8] sm:$0xff]
    %v49 = vld [vmem:[%s2 + $0x10] sm:$0xff]
    %v50 = vld [vmem:[%s2 + $0x18] sm:$0xff]
    %v51 = vld [vmem:[%s2 + $0x20] sm:$0xff]
    %v52 = vld [vmem:[%s2 + $0x28] sm:$0xff]
    %v53 = vld [vmem:[%s2 + $0x30] sm:$0xff]
    %v54 = vld [vmem:[%s2 + $0x38] sm:$0xff]
    %v55 = vpack.c.bf16 %v26, %v25
    %v56 = vld [vmem:[%s1] sm:$0xff]
    %v57 = vlaneseq
    %v58 = vshrl.u32 %v57, 7
    %v59 = vsub.s32 0, %v58
    %v60 = vrot.slane %v27, %v59
    %v61 = vlaneseq
    %v62 = vshrl.u32 %v61, 7
    %v63 = vsub.s32 4, %v62
    %v64 = vrot.slane %v27, %v63
    %v67 = vlaneseq
    %v68 = vshrl.u32 %v67, 7
    %v69 = vsub.s32 0, %v68
    %v70 = vrot.slane %v60, %v69
    %v71 = vlaneseq
    %v72 = vshrl.u32 %v71, 7
    %v73 = vsub.s32 0, %v72
    %v74 = vrot.slane %v64, %v73
    %v76 = vunpack.c.l.b16 %v56
    %v77 = vunpack.c.h.b16 %v56
    %v78 = vpack.c.b16 %v76, %v76
    %v79 = vpack.c.b16 %v77, %v77
    %vm80 = vcmask 64512
    %v82 = vsel %vm80, %v55, 0
    %vm84 = vcmask 1043456
    %v86 = vsel %vm84, %v78, 0
    %v89 = vsel %vm84, %v79, 0
    %91 = vmatprep.subr.bf16.mxu0 %v89
    %92 = vmatpush1.bf16.msra.mxu0 %v86
    %93 = vmatprep.subr.bf16.mxu0 0
    %94 = vmatpush1.bf16.msra.mxu0 0
    %95 = vmatprep.subr.bf16.mxu0 0
    %96 = vmatpush1.bf16.msra.mxu0 0
    %97 = vmatprep.subr.bf16.mxu0 0
    %98 = vmatpush1.bf16.msra.mxu0 0
    %99 = vmatprep.subr.bf16.mxu0 0
    %100 = vmatpush1.bf16.msra.mxu0 0
    %101 = vmatprep.subr.bf16.mxu0 0
    %102 = vmatpush1.bf16.msra.mxu0 0
    %103 = vmatprep.subr.bf16.mxu0 0
    %104 = vmatpush1.bf16.msra.mxu0 0
    %105 = vmatprep.subr.bf16.mxu0 0
    %106 = vmatpush1.bf16.msra.mxu0 0
    %107 = vmatprep.subr.bf16.mxu0 0
    %108 = vmatpush1.bf16.msra.mxu0 0
    %109 = vmatprep.subr.bf16.mxu0 0
    %110 = vmatpush1.bf16.msra.mxu0 0
    %111 = vmatprep.subr.bf16.mxu0 0
    %112 = vmatpush1.bf16.msra.mxu0 0
    %113 = vmatprep.subr.bf16.mxu0 0
    %114 = vmatpush1.bf16.msra.mxu0 0
    %115 = vmatprep.subr.bf16.mxu0 0
    %116 = vmatpush1.bf16.msra.mxu0 0
    %117 = vmatprep.subr.bf16.mxu0 0
    %118 = vmatpush1.bf16.msra.mxu0 0
    %119 = vmatprep.subr.bf16.mxu0 0
    %120 = vmatpush1.bf16.msra.mxu0 0
    %121 = vmatprep.subr.bf16.mxu0 0
    %122 = vmatpush1.bf16.msra.mxu0 0
    %123 = vmatprep.mubr.bf16.mxu0 0
    %124 = vmatmul.mubr.bf16.gmra.mrb[0].mxu0 %v82
    %v125 = vpop.f32.mrb[0].mxu0
    %v126 = vadd.f32 %v70, %v125
    %v127 = vpop.f32.mrb[0].mxu0
    %v128 = vadd.f32 %v74, %v127
    %v129 = vpop.f32.mrb[0].mxu0
    %v130 = vadd.f32 %v70, %v129
    %v131 = vpop.f32.mrb[0].mxu0
    %v132 = vadd.f32 %v74, %v131
    %133 = vdwg.mxu0
    %v142 = vunpack.c.l.b16 %v47
    %v143 = vunpack.c.h.b16 %v47
    %v144 = vunpack.c.l.b16 %v48
    %v145 = vunpack.c.h.b16 %v48
    %v146 = vunpack.c.l.b16 %v49
    %v147 = vunpack.c.h.b16 %v49
    %v148 = vunpack.c.l.b16 %v50
    %v149 = vunpack.c.h.b16 %v50
    %v150 = vunpack.c.l.b16 %v51
    %v151 = vunpack.c.h.b16 %v51
    %v152 = vunpack.c.l.b16 %v52
    %v153 = vunpack.c.h.b16 %v52
    %v154 = vunpack.c.l.b16 %v53
    %v155 = vunpack.c.h.b16 %v53
    %v156 = vunpack.c.l.b16 %v54
    %v157 = vunpack.c.h.b16 %v54
    %v158 = vpack.c.b16 %v144, %v142
    %v159 = vpack.c.b16 %v145, %v143
    %v160 = vpack.c.b16 %v148, %v146
    %v161 = vpack.c.b16 %v149, %v147
    %v162 = vpack.c.b16 %v152, %v150
    %v163 = vpack.c.b16 %v153, %v151
    %v164 = vpack.c.b16 %v156, %v154
    %v165 = vpack.c.b16 %v157, %v155
    %vm174 = vcmask 523264
    %v176 = vsel %vm174, 0, 0
    %178 = vmatprep.subr.bf16.mxu0 %v159
    %179 = vmatpush1.bf16.msra.mxu0 %v158
    %180 = vmatprep.subr.bf16.mxu0 %v161
    %181 = vmatpush1.bf16.msra.mxu0 %v160
    %182 = vmatprep.subr.bf16.mxu0 %v163
    %183 = vmatpush1.bf16.msra.mxu0 %v162
    %184 = vmatprep.subr.bf16.mxu0 %v165
    %185 = vmatpush1.bf16.msra.mxu0 %v164
    %186 = vmatprep.subr.bf16.mxu0 0
    %187 = vmatpush1.bf16.msra.mxu0 0
    %188 = vmatprep.subr.bf16.mxu0 0
    %189 = vmatpush1.bf16.msra.mxu0 0
    %190 = vmatprep.subr.bf16.mxu0 0
    %191 = vmatpush1.bf16.msra.mxu0 0
    %192 = vmatprep.subr.bf16.mxu0 0
    %193 = vmatpush1.bf16.msra.mxu0 0
    %194 = vmatprep.subr.bf16.mxu0 0
    %195 = vmatpush1.bf16.msra.mxu0 0
    %196 = vmatprep.subr.bf16.mxu0 0
    %197 = vmatpush1.bf16.msra.mxu0 0
    %198 = vmatprep.subr.bf16.mxu0 0
    %199 = vmatpush1.bf16.msra.mxu0 0
    %200 = vmatprep.subr.bf16.mxu0 0
    %201 = vmatpush1.bf16.msra.mxu0 0
    %202 = vmatprep.subr.bf16.mxu0 0
    %203 = vmatpush1.bf16.msra.mxu0 0
    %204 = vmatprep.subr.bf16.mxu0 0
    %205 = vmatpush1.bf16.msra.mxu0 0
    %206 = vmatprep.subr.bf16.mxu0 0
    %207 = vmatpush1.bf16.msra.mxu0 0
    %208 = vmatprep.subr.bf16.mxu0 0
    %209 = vmatpush1.bf16.msra.mxu0 0
    %210 = vmatprep.mubr.bf16.mxu0 0
    %211 = vmatmul.mubr.bf16.gmra.mrb[0].mxu0 %v176
    %v212 = vpop.f32.mrb[0].mxu0
    %v213 = vadd.f32 %v42, %v212
    %v214 = vpop.f32.mrb[0].mxu0
    %v215 = vadd.f32 %v46, %v214
    %v216 = vpop.f32.mrb[0].mxu0
    %v217 = vpop.f32.mrb[0].mxu0
    %218 = vdwg.mxu0
    %v219 = vadd.f32 %v126, %v213
    %v220 = vxor.u32 %v219, 2147483648
    %v221 = vmul.f32 %v220, 1.442695
    %v222 = vpow.pop %v221
    %v223 = vadd.f32 %v222, 1.0
    %v224 = vrcp.pop %v223
    %v225 = vmul.f32 1.0, %v224
    %v226 = vmul.f32 %v225, %v215
    %v227 = vadd.f32 %v128, %v226
    %v228 = vtanh.pop %v227
    %v229 = vsub.f32 1.0, %v225
    %231 = vrot.lane.b32.xlu0 %v228, 64
    %v232 = vpop.permute.xlu0 %231
    %v234 = vmul.f32 %v229, %v232
    %v235 = vmul.f32 %v225, 0.0
    %v236 = vadd.f32 %v234, %v235
    %v237 = vpack.c.bf16 %v236, %v236
    %239 = vrot.lane.b32.xlu0 %v237, 64
    %v240 = vpop.permute.xlu0 %239
    %v242 = vsel %vm174, %v240, 0
    %244 = vmatprep.subr.bf16.mxu0 %v159
    %245 = vmatpush1.bf16.msra.mxu0 %v158
    %246 = vmatprep.subr.bf16.mxu0 %v161
    %247 = vmatpush1.bf16.msra.mxu0 %v160
    %248 = vmatprep.subr.bf16.mxu0 %v163
    %249 = vmatpush1.bf16.msra.mxu0 %v162
    %250 = vmatprep.subr.bf16.mxu0 %v165
    %251 = vmatpush1.bf16.msra.mxu0 %v164
    %252 = vmatprep.subr.bf16.mxu0 0
    %253 = vmatpush1.bf16.msra.mxu0 0
    %254 = vmatprep.subr.bf16.mxu0 0
    %255 = vmatpush1.bf16.msra.mxu0 0
    %256 = vmatprep.subr.bf16.mxu0 0
    %257 = vmatpush1.bf16.msra.mxu0 0
    %258 = vmatprep.subr.bf16.mxu0 0
    %259 = vmatpush1.bf16.msra.mxu0 0
    %260 = vmatprep.subr.bf16.mxu0 0
    %261 = vmatpush1.bf16.msra.mxu0 0
    %262 = vmatprep.subr.bf16.mxu0 0
    %263 = vmatpush1.bf16.msra.mxu0 0
    %264 = vmatprep.subr.bf16.mxu0 0
    %265 = vmatpush1.bf16.msra.mxu0 0
    %266 = vmatprep.subr.bf16.mxu0 0
    %267 = vmatpush1.bf16.msra.mxu0 0
    %268 = vmatprep.subr.bf16.mxu0 0
    %269 = vmatpush1.bf16.msra.mxu0 0
    %270 = vmatprep.subr.bf16.mxu0 0
    %271 = vmatpush1.bf16.msra.mxu0 0
    %272 = vmatprep.subr.bf16.mxu0 0
    %273 = vmatpush1.bf16.msra.mxu0 0
    %274 = vmatprep.subr.bf16.mxu0 0
    %275 = vmatpush1.bf16.msra.mxu0 0
    %276 = vmatprep.mubr.bf16.mxu0 0
    %277 = vmatmul.mubr.bf16.gmra.mrb[0].mxu0 %v242
    %v278 = vpop.f32.mrb[0].mxu0
    %v279 = vadd.f32 %v42, %v278
    %v280 = vpop.f32.mrb[0].mxu0
    %v281 = vadd.f32 %v46, %v280
    %v282 = vpop.f32.mrb[0].mxu0
    %v283 = vpop.f32.mrb[0].mxu0
    %284 = vdwg.mxu0
    %v286 = vrot.slane %v279, 6
    %v288 = vadd.f32 %v126, %v286
    %v289 = vxor.u32 %v288, 2147483648
    %v290 = vmul.f32 %v289, 1.442695
    %v291 = vpow.pop %v290
    %v292 = vadd.f32 %v291, 1.0
    %v293 = vrcp.pop %v292
    %v294 = vmul.f32 1.0, %v293
    %v296 = vrot.slane %v281, 6
    %v298 = vmul.f32 %v294, %v296
    %v299 = vadd.f32 %v128, %v298
    %v300 = vtanh.pop %v299
    %v301 = vsub.f32 1.0, %v294
    %303 = vrot.lane.b32.xlu0 %v300, 64
    %v304 = vpop.permute.xlu0 %303
    %v306 = vmul.f32 %v301, %v304
    %v308 = vrot.slane %v236, 6
    %v310 = vmul.f32 %v294, %v308
    %v311 = vadd.f32 %v306, %v310
    %v312 = vpack.c.bf16 %v311, %v311
    %v314 = vrot.slane %v312, 1
    %315 = vrot.lane.b32.xlu0 %v314, 64
    %v316 = vpop.permute.xlu0 %315
    %v318 = vsel %vm174, %v316, 0
    %320 = vmatprep.subr.bf16.mxu0 %v159
    %321 = vmatpush1.bf16.msra.mxu0 %v158
    %322 = vmatprep.subr.bf16.mxu0 %v161
    %323 = vmatpush1.bf16.msra.mxu0 %v160
    %324 = vmatprep.subr.bf16.mxu0 %v163
    %325 = vmatpush1.bf16.msra.mxu0 %v162
    %326 = vmatprep.subr.bf16.mxu0 %v165
    %327 = vmatpush1.bf16.msra.mxu0 %v164
    %328 = vmatprep.subr.bf16.mxu0 0
    %329 = vmatpush1.bf16.msra.mxu0 0
    %330 = vmatprep.subr.bf16.mxu0 0
    %331 = vmatpush1.bf16.msra.mxu0 0
    %332 = vmatprep.subr.bf16.mxu0 0
    %333 = vmatpush1.bf16.msra.mxu0 0
    %334 = vmatprep.subr.bf16.mxu0 0
    %335 = vmatpush1.bf16.msra.mxu0 0
    %336 = vmatprep.subr.bf16.mxu0 0
    %337 = vmatpush1.bf16.msra.mxu0 0
    %338 = vmatprep.subr.bf16.mxu0 0
    %339 = vmatpush1.bf16.msra.mxu0 0
    %340 = vmatprep.subr.bf16.mxu0 0
    %341 = vmatpush1.bf16.msra.mxu0 0
    %342 = vmatprep.subr.bf16.mxu0 0
    %343 = vmatpush1.bf16.msra.mxu0 0
    %344 = vmatprep.subr.bf16.mxu0 0
    %345 = vmatpush1.bf16.msra.mxu0 0
    %346 = vmatprep.subr.bf16.mxu0 0
    %347 = vmatpush1.bf16.msra.mxu0 0
    %348 = vmatprep.subr.bf16.mxu0 0
    %349 = vmatpush1.bf16.msra.mxu0 0
    %350 = vmatprep.subr.bf16.mxu0 0
    %351 = vmatpush1.bf16.msra.mxu0 0
    %352 = vmatprep.mubr.bf16.mxu0 0
    %353 = vmatmul.mubr.bf16.gmra.mrb[0].mxu0 %v318
    %v354 = vpop.f32.mrb[0].mxu0
    %v355 = vadd.f32 %v42, %v354
    %v356 = vpop.f32.mrb[0].mxu0
    %v357 = vadd.f32 %v46, %v356
    %v358 = vpop.f32.mrb[0].mxu0
    %v359 = vpop.f32.mrb[0].mxu0
    %360 = vdwg.mxu0
    %v362 = vrot.slane %v355, 4
    %v364 = vadd.f32 %v126, %v362
    %v365 = vxor.u32 %v364, 2147483648
    %v366 = vmul.f32 %v365, 1.442695
    %v367 = vpow.pop %v366
    %v368 = vadd.f32 %v367, 1.0
    %v369 = vrcp.pop %v368
    %v370 = vmul.f32 1.0, %v369
    %v372 = vrot.slane %v357, 4
    %v374 = vmul.f32 %v370, %v372
    %v375 = vadd.f32 %v128, %v374
    %v376 = vtanh.pop %v375
    %v377 = vsub.f32 1.0, %v370
    %379 = vrot.lane.b32.xlu0 %v376, 64
    %v380 = vpop.permute.xlu0 %379
    %v382 = vmul.f32 %v377, %v380
    %v384 = vrot.slane %v311, 6
    %v386 = vmul.f32 %v370, %v384
    %v387 = vadd.f32 %v382, %v386
    %v388 = vpack.c.bf16 %v387, %v387
    %v390 = vrot.slane %v388, 2
    %391 = vrot.lane.b32.xlu0 %v390, 64
    %v392 = vpop.permute.xlu0 %391
    %v394 = vsel %vm174, %v392, 0
    %396 = vmatprep.subr.bf16.mxu0 %v159
    %397 = vmatpush1.bf16.msra.mxu0 %v158
    %398 = vmatprep.subr.bf16.mxu0 %v161
    %399 = vmatpush1.bf16.msra.mxu0 %v160
    %400 = vmatprep.subr.bf16.mxu0 %v163
    %401 = vmatpush1.bf16.msra.mxu0 %v162
    %402 = vmatprep.subr.bf16.mxu0 %v165
    %403 = vmatpush1.bf16.msra.mxu0 %v164
    %404 = vmatprep.subr.bf16.mxu0 0
    %405 = vmatpush1.bf16.msra.mxu0 0
    %406 = vmatprep.subr.bf16.mxu0 0
    %407 = vmatpush1.bf16.msra.mxu0 0
    %408 = vmatprep.subr.bf16.mxu0 0
    %409 = vmatpush1.bf16.msra.mxu0 0
    %410 = vmatprep.subr.bf16.mxu0 0
    %411 = vmatpush1.bf16.msra.mxu0 0
    %412 = vmatprep.subr.bf16.mxu0 0
    %413 = vmatpush1.bf16.msra.mxu0 0
    %414 = vmatprep.subr.bf16.mxu0 0
    %415 = vmatpush1.bf16.msra.mxu0 0
    %416 = vmatprep.subr.bf16.mxu0 0
    %417 = vmatpush1.bf16.msra.mxu0 0
    %418 = vmatprep.subr.bf16.mxu0 0
    %419 = vmatpush1.bf16.msra.mxu0 0
    %420 = vmatprep.subr.bf16.mxu0 0
    %421 = vmatpush1.bf16.msra.mxu0 0
    %422 = vmatprep.subr.bf16.mxu0 0
    %423 = vmatpush1.bf16.msra.mxu0 0
    %424 = vmatprep.subr.bf16.mxu0 0
    %425 = vmatpush1.bf16.msra.mxu0 0
    %426 = vmatprep.subr.bf16.mxu0 0
    %427 = vmatpush1.bf16.msra.mxu0 0
    %428 = vmatprep.mubr.bf16.mxu0 0
    %429 = vmatmul.mubr.bf16.gmra.mrb[0].mxu0 %v394
    %v430 = vpop.f32.mrb[0].mxu0
    %v431 = vadd.f32 %v42, %v430
    %v432 = vpop.f32.mrb[0].mxu0
    %v433 = vadd.f32 %v46, %v432
    %v434 = vpop.f32.mrb[0].mxu0
    %v435 = vpop.f32.mrb[0].mxu0
    %436 = vdwg.mxu0
    %v438 = vrot.slane %v431, 2
    %v440 = vadd.f32 %v126, %v438
    %v441 = vxor.u32 %v440, 2147483648
    %v442 = vmul.f32 %v441, 1.442695
    %v443 = vpow.pop %v442
    %v444 = vadd.f32 %v443, 1.0
    %v445 = vrcp.pop %v444
    %v446 = vmul.f32 1.0, %v445
    %v448 = vrot.slane %v433, 2
    %v450 = vmul.f32 %v446, %v448
    %v451 = vadd.f32 %v128, %v450
    %v452 = vtanh.pop %v451
    %v453 = vsub.f32 1.0, %v446
    %455 = vrot.lane.b32.xlu0 %v452, 64
    %v456 = vpop.permute.xlu0 %455
    %v458 = vmul.f32 %v453, %v456
    %v460 = vrot.slane %v387, 6
    %v462 = vmul.f32 %v446, %v460
    %v463 = vadd.f32 %v458, %v462
    %v464 = vpack.c.bf16 %v463, %v463
    %v466 = vrot.slane %v464, 3
    %467 = vrot.lane.b32.xlu0 %v466, 64
    %v468 = vpop.permute.xlu0 %467
    %v470 = vsel %vm174, %v468, 0
    %472 = vmatprep.subr.bf16.mxu0 %v159
    %473 = vmatpush1.bf16.msra.mxu0 %v158
    %474 = vmatprep.subr.bf16.mxu0 %v161
    %475 = vmatpush1.bf16.msra.mxu0 %v160
    %476 = vmatprep.subr.bf16.mxu0 %v163
    %477 = vmatpush1.bf16.msra.mxu0 %v162
    %478 = vmatprep.subr.bf16.mxu0 %v165
    %479 = vmatpush1.bf16.msra.mxu0 %v164
    %480 = vmatprep.subr.bf16.mxu0 0
    %481 = vmatpush1.bf16.msra.mxu0 0
    %482 = vmatprep.subr.bf16.mxu0 0
    %483 = vmatpush1.bf16.msra.mxu0 0
    %484 = vmatprep.subr.bf16.mxu0 0
    %485 = vmatpush1.bf16.msra.mxu0 0
    %486 = vmatprep.subr.bf16.mxu0 0
    %487 = vmatpush1.bf16.msra.mxu0 0
    %488 = vmatprep.subr.bf16.mxu0 0
    %489 = vmatpush1.bf16.msra.mxu0 0
    %490 = vmatprep.subr.bf16.mxu0 0
    %491 = vmatpush1.bf16.msra.mxu0 0
    %492 = vmatprep.subr.bf16.mxu0 0
    %493 = vmatpush1.bf16.msra.mxu0 0
    %494 = vmatprep.subr.bf16.mxu0 0
    %495 = vmatpush1.bf16.msra.mxu0 0
    %496 = vmatprep.subr.bf16.mxu0 0
    %497 = vmatpush1.bf16.msra.mxu0 0
    %498 = vmatprep.subr.bf16.mxu0 0
    %499 = vmatpush1.bf16.msra.mxu0 0
    %500 = vmatprep.subr.bf16.mxu0 0
    %501 = vmatpush1.bf16.msra.mxu0 0
    %502 = vmatprep.subr.bf16.mxu0 0
    %503 = vmatpush1.bf16.msra.mxu0 0
    %504 = vmatprep.mubr.bf16.mxu0 0
    %505 = vmatmul.mubr.bf16.gmra.mrb[0].mxu0 %v470
    %v506 = vpop.f32.mrb[0].mxu0
    %v507 = vadd.f32 %v42, %v506
    %v508 = vpop.f32.mrb[0].mxu0
    %v509 = vadd.f32 %v46, %v508
    %v510 = vpop.f32.mrb[0].mxu0
    %v511 = vpop.f32.mrb[0].mxu0
    %512 = vdwg.mxu0
    %v513 = vadd.f32 %v130, %v507
    %v514 = vxor.u32 %v513, 2147483648
    %v515 = vmul.f32 %v514, 1.442695
    %v516 = vpow.pop %v515
    %v517 = vadd.f32 %v516, 1.0
    %v518 = vrcp.pop %v517
    %v519 = vmul.f32 1.0, %v518
    %v520 = vmul.f32 %v519, %v509
    %v521 = vadd.f32 %v132, %v520
    %v522 = vtanh.pop %v521
    %v523 = vsub.f32 1.0, %v519
    %525 = vrot.lane.b32.xlu0 %v522, 64
    %v526 = vpop.permute.xlu0 %525
    %v528 = vmul.f32 %v523, %v526
    %v530 = vrot.slane %v463, 6
    %v532 = vmul.f32 %v519, %v530
    %v533 = vadd.f32 %v528, %v532
    %v534 = vpack.c.bf16 %v533, %v533
    %536 = vrot.lane.b32.xlu0 %v534, 64
    %v537 = vpop.permute.xlu0 %536
    %v539 = vsel %vm174, %v537, 0
    %541 = vmatprep.subr.bf16.mxu0 %v159
    %542 = vmatpush1.bf16.msra.mxu0 %v158
    %543 = vmatprep.subr.bf16.mxu0 %v161
    %544 = vmatpush1.bf16.msra.mxu0 %v160
    %545 = vmatprep.subr.bf16.mxu0 %v163
    %546 = vmatpush1.bf16.msra.mxu0 %v162
    %547 = vmatprep.subr.bf16.mxu0 %v165
    %548 = vmatpush1.bf16.msra.mxu0 %v164
    %549 = vmatprep.subr.bf16.mxu0 0
    %550 = vmatpush1.bf16.msra.mxu0 0
    %551 = vmatprep.subr.bf16.mxu0 0
    %552 = vmatpush1.bf16.msra.mxu0 0
    %553 = vmatprep.subr.bf16.mxu0 0
    %554 = vmatpush1.bf16.msra.mxu0 0
    %555 = vmatprep.subr.bf16.mxu0 0
    %556 = vmatpush1.bf16.msra.mxu0 0
    %557 = vmatprep.subr.bf16.mxu0 0
    %558 = vmatpush1.bf16.msra.mxu0 0
    %559 = vmatprep.subr.bf16.mxu0 0
    %560 = vmatpush1.bf16.msra.mxu0 0
    %561 = vmatprep.subr.bf16.mxu0 0
    %562 = vmatpush1.bf16.msra.mxu0 0
    %563 = vmatprep.subr.bf16.mxu0 0
    %564 = vmatpush1.bf16.msra.mxu0 0
    %565 = vmatprep.subr.bf16.mxu0 0
    %566 = vmatpush1.bf16.msra.mxu0 0
    %567 = vmatprep.subr.bf16.mxu0 0
    %568 = vmatpush1.bf16.msra.mxu0 0
    %569 = vmatprep.subr.bf16.mxu0 0
    %570 = vmatpush1.bf16.msra.mxu0 0
    %571 = vmatprep.subr.bf16.mxu0 0
    %572 = vmatpush1.bf16.msra.mxu0 0
    %573 = vmatprep.mubr.bf16.mxu0 0
    %574 = vmatmul.mubr.bf16.gmra.mrb[0].mxu0 %v539
    %v575 = vpop.f32.mrb[0].mxu0
    %v576 = vadd.f32 %v42, %v575
    %v577 = vpop.f32.mrb[0].mxu0
    %v578 = vadd.f32 %v46, %v577
    %v579 = vpop.f32.mrb[0].mxu0
    %v580 = vpop.f32.mrb[0].mxu0
    %581 = vdwg.mxu0
    %v583 = vrot.slane %v576, 6
    %v585 = vadd.f32 %v130, %v583
    %v586 = vxor.u32 %v585, 2147483648
    %v587 = vmul.f32 %v586, 1.442695
    %v588 = vpow.pop %v587
    %v589 = vadd.f32 %v588, 1.0
    %v590 = vrcp.pop %v589
    %v591 = vmul.f32 1.0, %v590
    %v593 = vrot.slane %v578, 6
    %v595 = vmul.f32 %v591, %v593
    %v596 = vadd.f32 %v132, %v595
    %v597 = vtanh.pop %v596
    %v598 = vsub.f32 1.0, %v591
    %600 = vrot.lane.b32.xlu0 %v597, 64
    %v601 = vpop.permute.xlu0 %600
    %v603 = vmul.f32 %v598, %v601
    %v605 = vrot.slane %v533, 6
    %v607 = vmul.f32 %v591, %v605
    %v608 = vadd.f32 %v603, %v607
    %609 = vrot.lane.b32.xlu0 %v236, 64
    %v610 = vpop.permute.xlu0 %609
    %v613 = vrot.slane %v608, 2
    %614 = vrot.lane.b32.xlu0 %v613, 64
    %v615 = vpop.permute.xlu0 %614
    %vm617 = vcmask 261120
    %v618 = vsel %vm617, %v610, %v615
    %619 = vrot.lane.b32.xlu0 %v311, 64
    %v620 = vpop.permute.xlu0 %619
    %622 = vrot.lane.b32.xlu0 %v605, 64
    %v623 = vpop.permute.xlu0 %622
    %v625 = vsel %vm617, %v620, %v623
    %626 = vrot.lane.b32.xlu0 %v387, 64
    %v627 = vpop.permute.xlu0 %626
    %v629 = vrot.slane %v463, 2
    %630 = vrot.lane.b32.xlu0 %v629, 64
    %v631 = vpop.permute.xlu0 %630
    %v633 = vsel %vm617, %v627, %v631
    %634 = vrot.lane.b32.xlu0 %v463, 64
    %v635 = vpop.permute.xlu0 %634
    %637 = vrot.lane.b32.xlu0 %v460, 64
    %v638 = vpop.permute.xlu0 %637
    %v640 = vsel %vm617, %v635, %v638
    %641 = vrot.lane.b32.xlu0 %v533, 64
    %v642 = vpop.permute.xlu0 %641
    %v644 = vrot.slane %v311, 2
    %645 = vrot.lane.b32.xlu0 %v644, 64
    %v646 = vpop.permute.xlu0 %645
    %v648 = vsel %vm617, %v642, %v646
    %649 = vrot.lane.b32.xlu0 %v608, 64
    %v650 = vpop.permute.xlu0 %649
    %652 = vrot.lane.b32.xlu0 %v308, 64
    %v653 = vpop.permute.xlu0 %652
    %v655 = vsel %vm617, %v650, %v653
    %vm656 = vcmask 1041408
    %v657 = vsel %vm656, %v618, %v625
    %v658 = vsel %vm84, %v657, %v633
    %vm659 = vcmask 1045504
    %v660 = vsel %vm659, %v658, %v640
    %v661 = vsel %vm656, %v648, %v655
    %v663 = vrot.slane %v26, 4
    %v666 = vrot.slane %v25, 4
    %v668 = vsel %vm656, %v663, %v26
    %v669 = vsel %vm84, %v668, %v663
    %v670 = vsel %vm659, %v669, %v25
    %v671 = vsel %vm656, %v666, %v25
    %v672 = vpack.c.bf16 %v661, %v660
    %v673 = vld [vmem:[%s3] sm:$0xf]
    %v674 = vld [vmem:[%s3 + $0x4] sm:$0xf]
    %v675 = vld [vmem:[%s3 + $0x8] sm:$0xf]
    %v676 = vld [vmem:[%s3 + $0xc] sm:$0xf]
    %v677 = vld [vmem:[%s3 + $0x10] sm:$0xf]
    %v678 = vld [vmem:[%s3 + $0x14] sm:$0xf]
    %v679 = vld [vmem:[%s3 + $0x18] sm:$0xf]
    %v680 = vld [vmem:[%s3 + $0x1c] sm:$0xf]
    %v681 = vlaneseq
    %v682 = vshrl.u32 %v681, 7
    %v683 = vsub.s32 2, %v682
    %v684 = vrot.slane %v27, %v683
    %v693 = vunpack.c.l.b16 %v673
    %v694 = vunpack.c.l.b16 %v674
    %v695 = vunpack.c.l.b16 %v675
    %v696 = vunpack.c.l.b16 %v676
    %v697 = vunpack.c.l.b16 %v677
    %v698 = vunpack.c.l.b16 %v678
    %v699 = vunpack.c.l.b16 %v679
    %v700 = vunpack.c.l.b16 %v680
    %v701 = vpack.c.b16 %v694, %v693
    %v702 = vpack.c.b16 %v696, %v695
    %v703 = vpack.c.b16 %v698, %v697
    %v704 = vpack.c.b16 %v700, %v699
    %v710 = vsel %vm174, %v672, 0
    %712 = vmatprep.subr.bf16.mxu0 0
    %713 = vmatpush1.bf16.msra.mxu0 %v701
    %714 = vmatprep.subr.bf16.mxu0 0
    %715 = vmatpush1.bf16.msra.mxu0 %v702
    %716 = vmatprep.subr.bf16.mxu0 0
    %717 = vmatpush1.bf16.msra.mxu0 %v703
    %718 = vmatprep.subr.bf16.mxu0 0
    %719 = vmatpush1.bf16.msra.mxu0 %v704
    %720 = vmatprep.subr.bf16.mxu0 0
    %721 = vmatpush1.bf16.msra.mxu0 0
    %722 = vmatprep.subr.bf16.mxu0 0
    %723 = vmatpush1.bf16.msra.mxu0 0
    %724 = vmatprep.subr.bf16.mxu0 0
    %725 = vmatpush1.bf16.msra.mxu0 0
    %726 = vmatprep.subr.bf16.mxu0 0
    %727 = vmatpush1.bf16.msra.mxu0 0
    %728 = vmatprep.subr.bf16.mxu0 0
    %729 = vmatpush1.bf16.msra.mxu0 0
    %730 = vmatprep.subr.bf16.mxu0 0
    %731 = vmatpush1.bf16.msra.mxu0 0
    %732 = vmatprep.subr.bf16.mxu0 0
    %733 = vmatpush1.bf16.msra.mxu0 0
    %734 = vmatprep.subr.bf16.mxu0 0
    %735 = vmatpush1.bf16.msra.mxu0 0
    %736 = vmatprep.subr.bf16.mxu0 0
    %737 = vmatpush1.bf16.msra.mxu0 0
    %738 = vmatprep.subr.bf16.mxu0 0
    %739 = vmatpush1.bf16.msra.mxu0 0
    %740 = vmatprep.subr.bf16.mxu0 0
    %741 = vmatpush1.bf16.msra.mxu0 0
    %742 = vmatprep.subr.bf16.mxu0 0
    %743 = vmatpush1.bf16.msra.mxu0 0
    %744 = vmatprep.mubr.bf16.mxu0 0
    %745 = vmatmul.mubr.bf16.gmra.mrb[0].mxu0 %v710
    %v746 = vpop.f32.mrb[0].mxu0
    %v747 = vadd.f32 %v684, %v746
    %v748 = vpop.f32.mrb[0].mxu0
    %v749 = vpop.f32.mrb[0].mxu0
    %v750 = vadd.f32 %v684, %v749
    %v751 = vpop.f32.mrb[0].mxu0
    %752 = vdwg.mxu0
    %v753 = vmax.f32 %v747, 0.0
    %v754 = vmax.f32 %v750, 0.0
    %v755 = vpack.c.bf16 %v754, %v753
    %v756 = vld [vmem:[%s4] sm:$0xf]
    %v757 = vld [vmem:[%s4 + $0x4] sm:$0xf]
    %v758 = vlaneseq
    %v759 = vshrl.u32 %v758, 7
    %v760 = vsub.s32 3, %v759
    %v761 = vrot.slane %v27, %v760
    %v764 = vunpack.c.l.b16 %v756
    %v765 = vunpack.c.l.b16 %v757
    %v766 = vpack.c.b16 %v765, %v764
    %vm768 = vcmask 130048
    %v770 = vsel %vm768, %v755, 0
    %772 = vmatprep.subr.bf16.mxu0 0
    %773 = vmatpush1.bf16.msra.mxu0 %v766
    %774 = vmatprep.subr.bf16.mxu0 0
    %775 = vmatpush1.bf16.msra.mxu0 0
    %776 = vmatprep.subr.bf16.mxu0 0
    %777 = vmatpush1.bf16.msra.mxu0 0
    %778 = vmatprep.subr.bf16.mxu0 0
    %779 = vmatpush1.bf16.msra.mxu0 0
    %780 = vmatprep.subr.bf16.mxu0 0
    %781 = vmatpush1.bf16.msra.mxu0 0
    %782 = vmatprep.subr.bf16.mxu0 0
    %783 = vmatpush1.bf16.msra.mxu0 0
    %784 = vmatprep.subr.bf16.mxu0 0
    %785 = vmatpush1.bf16.msra.mxu0 0
    %786 = vmatprep.subr.bf16.mxu0 0
    %787 = vmatpush1.bf16.msra.mxu0 0
    %788 = vmatprep.subr.bf16.mxu0 0
    %789 = vmatpush1.bf16.msra.mxu0 0
    %790 = vmatprep.subr.bf16.mxu0 0
    %791 = vmatpush1.bf16.msra.mxu0 0
    %792 = vmatprep.subr.bf16.mxu0 0
    %793 = vmatpush1.bf16.msra.mxu0 0
    %794 = vmatprep.subr.bf16.mxu0 0
    %795 = vmatpush1.bf16.msra.mxu0 0
    %796 = vmatprep.subr.bf16.mxu0 0
    %797 = vmatpush1.bf16.msra.mxu0 0
    %798 = vmatprep.subr.bf16.mxu0 0
    %799 = vmatpush1.bf16.msra.mxu0 0
    %800 = vmatprep.subr.bf16.mxu0 0
    %801 = vmatpush1.bf16.msra.mxu0 0
    %802 = vmatprep.subr.bf16.mxu0 0
    %803 = vmatpush1.bf16.msra.mxu0 0
    %804 = vmatprep.mubr.bf16.mxu0 0
    %805 = vmatmul.mubr.bf16.gmra.mrb[0].mxu0 %v770
    %v806 = vpop.f32.mrb[0].mxu0
    %v807 = vadd.f32 %v761, %v806
    %v808 = vpop.f32.mrb[0].mxu0
    %v809 = vpop.f32.mrb[0].mxu0
    %v810 = vadd.f32 %v761, %v809
    %v811 = vpop.f32.mrb[0].mxu0
    %812 = vdwg.mxu0
    %v813 = vmax.f32 %v807, 0.0
    %v814 = vmax.f32 %v810, 0.0
    %v815 = vand.u32 2147483647, %v807
    %v816 = vand.u32 2147483647, %v810
    %v817 = vsub.f32 0.0, %v815
    %v818 = vsub.f32 0.0, %v816
    %v819 = vmul.f32 %v817, 1.442695
    %v820 = vpow.pop %v819
    %v821 = vmul.f32 %v818, 1.442695
    %v822 = vpow.pop %v821
    %v823 = vadd.f32 %v820, 1.0
    %v824 = vlog2.pop %v823
    %v825 = vmul.f32 %v824, 0.6931472
    %v826 = vmul.f32 -0.5, %v820
    %v827 = vadd.f32 %v826, 1.0
    %v828 = vmul.f32 %v827, %v820
    %v829 = vand.u32 2147483647, %v820
    %vm830 = vcmp.lt.f32.partialorder %v829, 0.0004427343
    %v831 = vsel %vm830, %v828, %v825
    %v832 = vadd.f32 %v822, 1.0
    %v833 = vlog2.pop %v832
    %v834 = vmul.f32 %v833, 0.6931472
    %v835 = vmul.f32 -0.5, %v822
    %v836 = vadd.f32 %v835, 1.0
    %v837 = vmul.f32 %v836, %v822
    %v838 = vand.u32 2147483647, %v822
    %vm839 = vcmp.lt.f32.partialorder %v838, 0.0004427343
    %v840 = vsel %vm839, %v837, %v834
    %v841 = vadd.f32 %v813, %v831
    %v842 = vadd.f32 %v814, %v840
    %v843 = vadd.f32 %v841, 1e-06
    %v844 = vadd.f32 %v842, 1e-06
    %847 = vrot.lane.b32.xlu0 %v807, 4
    %v848 = vpop.permute.xlu0 %847
    %849 = vrot.lane.b32.xlu0 %v810, 4
    %v850 = vpop.permute.xlu0 %849
    %v853 = vsub.f32 %v670, %v848
    %v854 = vsub.f32 %v671, %v850
    %v855 = vmul.f32 %v853, %v853
    %v856 = vmul.f32 %v854, %v854
    %v857 = vmul.f32 %v843, 2.0
    %v858 = vmul.f32 %v844, 2.0
    %v859 = vmul.f32 %v857, %v843
    %v860 = vmul.f32 %v858, %v844
    %v861 = vrcp.pop %v859
    %v862 = vmul.f32 %v855, %v861
    %v863 = vrcp.pop %v860
    %v864 = vmul.f32 %v856, %v863
    %v865 = vlog2.pop %v843
    %v866 = vmul.f32 %v865, 0.6931472
    %v867 = vlog2.pop %v844
    %v868 = vmul.f32 %v867, 0.6931472
    %v869 = vadd.f32 %v862, %v866
    %v870 = vadd.f32 %v864, %v868
    %v871 = vadd.f32 %v869, 0.9189385
    %v872 = vadd.f32 %v870, 0.9189385
    %875 = vrot.lane.b32.xlu0 %v871, 124
    %v876 = vpop.permute.xlu0 %875
    %877 = vrot.lane.b32.xlu0 %v872, 124
    %v878 = vpop.permute.xlu0 %877
    %vm881 = vcmask 31744
    %v882 = vsel %vm881, %v876, 0.0
    %vm883 = vcmask 27648
    %v884 = vsel %vm883, %v878, 0.0
    %v885 = vadd.f32 %v882, %v884
    %886 = vadd.xlane.f32.xlu0 %v885
    %v887 = vpop.xlane.xlu0 %886
    %v888 = vrot.slane %v887, 4
    %v889 = vadd.f32 %v887, %v888
    %v890 = vrot.slane %v889, 2
    %v891 = vadd.f32 %v889, %v890
    %v892 = vrot.slane %v891, 1
    %v893 = vadd.f32 %v891, %v892
    %s894 = vtos %v893
    %s895 = scalar_lea.smem [#allocation2], 0
    %896 = sst [smem:[%s895]] %s894
    // Predicated region
    $region26: #{tpu_custom_call.1} parent=1 // pred_check
      _
    $region27: #{tpu_custom_call.1} parent=1 // pred_check_branch
      %898 = sbr.rel (0) target = $region29
    $region28: #{tpu_custom_call.1} parent=1 // pred_region
      %s900 = ssub.s32 16, 16
      %901 = vsyncadd [#allocation3], %s900
      %904 = dma.smem_to_hbm [#allocation2], 16, %s6, [#allocation3]
    $region29: #{tpu_custom_call.1} parent=1 // pred_fallthru
      _
    // Predicated region
    $region30: #{tpu_custom_call.1} parent=1 // pred_check
      _
    $region31: #{tpu_custom_call.1} parent=1 // pred_check_branch
      %906 = sbr.rel (0) target = $region33
    $region32: #{tpu_custom_call.1} parent=1 // pred_region
      %907 = dma.done [#allocation3], 16
    $region33: #{tpu_custom_call.1} parent=1 // pred_fallthru
      _
    %908 = sfence
    %909 = vsyncpa [#allocation3], 1

</llo_original>
